<compile_context>
chip_gen: v5e
topology: v5e:2x2
jax: 0.10.0
libtpu: 0.0.40
codegen_flags: <defaults>
</compile_context>

<pallas_src>
import numpy as np
import jax
import jax.numpy as jnp
from jax.experimental import pallas as pl
from jax.experimental.pallas import tpu as pltpu


def _make_ldam_ce_kernel(s_scale: float, n_rows: int, tile_rows: int, weighted: bool):
    s_scale = float(s_scale)
    inv_n = 1.0 / float(n_rows)

    def _tile_nll(logits_ref, target_ref, m_ref):
        x = logits_ref[...]                                   # (TN, C) f32
        tgt = target_ref[...]                                 # (TN, 1) i32
        m = m_ref[...]                                        # (1,  C) f32
        tn, c = x.shape

        # one-hot(target) as a boolean lane mask (no gather/scatter).
        col = jax.lax.broadcasted_iota(jnp.int32, (tn, c), 1)
        onehot = col == tgt                                   # (TN, C) bool

        # Folded margin: subtracting batch_m on the target column only is
        # identical to subtracting s * m through the one-hot mask.
        final = x - jnp.where(onehot, s_scale * m, 0.0)       # (TN, C)

        # numerically stable log-softmax cross entropy
        row_max = jnp.max(final, axis=-1, keepdims=True)      # (TN, 1)
        z = final - row_max
        lse = jnp.log(jnp.sum(jnp.exp(z), axis=-1, keepdims=True))
        tgt_z = jnp.sum(jnp.where(onehot, z, 0.0), axis=-1, keepdims=True)
        nll = lse - tgt_z                                     # (TN, 1)

        # mask rows of the (possibly padded) last tile
        row = pl.program_id(0) * tile_rows + jax.lax.broadcasted_iota(
            jnp.int32, (tn, 1), 0)
        valid = row < n_rows                                  # (TN, 1) bool
        return onehot, nll, valid

    if weighted:
        def kernel(logits_ref, target_ref, m_ref, w_ref, out_ref, num_acc, den_acc):
            pid = pl.program_id(0)

            @pl.when(pid == 0)
            def _init():
                num_acc[...] = jnp.zeros_like(num_acc)
                den_acc[...] = jnp.zeros_like(den_acc)

            onehot, nll, valid = _tile_nll(logits_ref, target_ref, m_ref)
            w_row = jnp.sum(jnp.where(onehot, w_ref[...], 0.0),
                            axis=-1, keepdims=True)           # (TN, 1)
            num_acc[...] += jnp.sum(jnp.where(valid, w_row * nll, 0.0),
                                    keepdims=True)
            den_acc[...] += jnp.sum(jnp.where(valid, w_row, 0.0),
                                    keepdims=True)

            @pl.when(pid == pl.num_programs(0) - 1)
            def _finalize():
                out_ref[...] = num_acc[...] / den_acc[...]
    else:
        def kernel(logits_ref, target_ref, m_ref, out_ref, num_acc):
            pid = pl.program_id(0)

            @pl.when(pid == 0)
            def _init():
                num_acc[...] = jnp.zeros_like(num_acc)

            _, nll, valid = _tile_nll(logits_ref, target_ref, m_ref)
            num_acc[...] += jnp.sum(jnp.where(valid, nll, 0.0), keepdims=True)

            @pl.when(pid == pl.num_programs(0) - 1)
            def _finalize():
                # unweighted mean: divide by the compile-time constant N
                out_ref[...] = num_acc[...] * inv_n

    return kernel


def ldam_loss_pallas(logits, target, m_list, s_scale, per_cls_weights=None,
                     block_rows=512):
    """logits: (N, C) f32, target: (N,) i32, m_list: (C,) f32 -> scalar loss."""
    N, C = logits.shape
    logits = logits.astype(jnp.float32)
    target2d = target.astype(jnp.int32).reshape(N, 1)
    m_row = m_list.astype(jnp.float32).reshape(1, C)
    weighted = per_cls_weights is not None

    # Pick a batch tile: large enough to amortize per-step overhead, small
    # enough that the double-buffered logits block fits comfortably inside the
    # default scoped VMEM on every generation (v5e 16 MiB ... v7x 32 MiB).
    vmem_budget = 10 << 20                       # bytes for 2x logits buffers
    bytes_per_row = C * 4
    max_rows_by_vmem = max(8, int(vmem_budget // (2 * bytes_per_row)))
    tn = min(int(block_rows), max_rows_by_vmem, N)
    if tn < N:
        tn = max(8, (tn // 8) * 8)               # multiple of 8 when tiling
    grid = (pl.cdiv(N, tn),)

    kernel = _make_ldam_ce_kernel(float(s_scale), N, tn, weighted)

    in_specs = [
        pl.BlockSpec((tn, C), lambda i: (i, 0)),   # logits tile (pipelined)
        pl.BlockSpec((tn, 1), lambda i: (i, 0)),   # target tile (pipelined)
        pl.BlockSpec((1, C), lambda i: (0, 0)),    # margins (resident)
    ]
    inputs = [logits, target2d, m_row]
    scratch = [pltpu.VMEM((1, 1), jnp.float32)]    # sum(w * nll) accumulator
    if weighted:
        w_row = per_cls_weights.astype(jnp.float32).reshape(1, C)
        in_specs.append(pl.BlockSpec((1, C), lambda i: (0, 0)))
        inputs.append(w_row)
        scratch.append(pltpu.VMEM((1, 1), jnp.float32))   # sum(w) accumulator

    # scoped VMEM actually needed (double-buffered tiles + resident rows + slack)
    vmem_need = 2 * (tn * C * 4 + tn * 4) + 4 * C * 4 + (2 << 20)
    vmem_limit = int(min(max(vmem_need, 16 << 20), 32 << 20))

    out = pl.pallas_call(
        kernel,
        out_shape=jax.ShapeDtypeStruct((1, 1), jnp.float32),
        grid=grid,
        in_specs=in_specs,
        out_specs=pl.BlockSpec((1, 1), lambda i: (0, 0)),
        scratch_shapes=scratch,
        compiler_params=pltpu.CompilerParams(
            dimension_semantics=("arbitrary",),   # batch axis is a reduction
            vmem_limit_bytes=vmem_limit,
        ),
    )(*inputs)
    return out[0, 0]


def ldam_loss_ref(logits, target, m_list, s_scale, per_cls_weights=None):
    """Pure-JAX reference mirroring the PyTorch module."""
    N, C = logits.shape
    onehot = jax.nn.one_hot(target, C, dtype=jnp.float32)
    batch_m = onehot @ m_list.reshape(C, 1)          # (N, 1)
    x_m = logits - batch_m * s_scale
    final = jnp.where(onehot.astype(bool), x_m, logits)
    logp = jax.nn.log_softmax(final, axis=-1)
    nll = -jnp.sum(onehot * logp, axis=-1)
    if per_cls_weights is None:
        return jnp.mean(nll)
    w_i = per_cls_weights[target]
    return jnp.sum(w_i * nll) / jnp.sum(w_i)


if __name__ == "__main__":
    # Deterministic parameter setup (mirrors LDAMLoss.__init__)
    num_classes = 16
    max_m = 0.5
    s_scale = 30.0
    cls_num_list = np.array([100, 80, 60, 50, 40, 30, 25, 20,
                             15, 12, 10, 8, 6, 5, 4, 2], dtype=np.float64)
    m_list_np = 1.0 / np.sqrt(np.sqrt(cls_num_list))
    m_list_np = m_list_np * (max_m / np.max(m_list_np))
    m_list = jnp.asarray(m_list_np, dtype=jnp.float32)

    key = jax.random.PRNGKey(0)
    k1, k2, k3, k4 = jax.random.split(key, 4)

    # Case 1: default module config (reweight_epoch=-1 -> weight=None), N=8
    N1 = 8
    logits1 = jax.random.normal(k1, (N1, num_classes), dtype=jnp.float32)
    target1 = jax.random.randint(k2, (N1,), 0, num_classes, dtype=jnp.int32)
    loss1 = ldam_loss_pallas(logits1, target1, m_list, s_scale)
    jax.block_until_ready(loss1)
    ref1 = ldam_loss_ref(logits1, target1, m_list, s_scale)
    assert jnp.allclose(loss1, ref1, atol=1e-5, rtol=1e-5), (loss1, ref1)

    # Case 2: multi-tile grid (masked, padded last tile) + reweighted path
    N2 = 40
    logits2 = jax.random.normal(k3, (N2, num_classes), dtype=jnp.float32)
    target2 = jax.random.randint(k4, (N2,), 0, num_classes, dtype=jnp.int32)
    betas = [0.0, 0.9999]
    eff = 1.0 - np.power(betas[1], cls_num_list)
    w_np = (1.0 - betas[1]) / eff
    w_np = w_np / np.sum(w_np) * num_classes
    w = jnp.asarray(w_np, dtype=jnp.float32)
    loss2 = ldam_loss_pallas(logits2, target2, m_list, s_scale,
                             per_cls_weights=w, block_rows=16)
    jax.block_until_ready(loss2)
    ref2 = ldam_loss_ref(logits2, target2, m_list, s_scale, per_cls_weights=w)
    assert jnp.allclose(loss2, ref2, atol=1e-5, rtol=1e-5), (loss2, ref2)

    print("KERNEL_OK")
</pallas_src>

<mosaic_0001>
module attributes {stable_mosaic.version = 11 : i64} {
  func.func @kernel(%arg0: i32, %arg1: memref<8x16xf32, #tpu.memory_space<vmem>>, %arg2: memref<8x1xi32, #tpu.memory_space<vmem>>, %arg3: memref<1x16xf32, #tpu.memory_space<vmem>>, %arg4: memref<1x1xf32, #tpu.memory_space<vmem>>, %arg5: memref<1x1xf32, #tpu.memory_space<vmem>>) attributes {dimension_semantics = [#tpu.dimension_semantics<arbitrary>], iteration_bounds = array<i64: 1>, scalar_prefetch = 0 : i64, scratch_operands = 1 : i64, tpu.core_type = #tpu.core_type<tc>, window_params = [{transform_indices = @transform_0, window_bounds = array<i64: 8, 16>}, {transform_indices = @transform_1, window_bounds = array<i64: 8, 1>}, {pipeline_mode = #tpu.pipeline_mode<synchronous>, transform_indices = @transform_2, window_bounds = array<i64: 1, 16>}, {pipeline_mode = #tpu.pipeline_mode<synchronous>, transform_indices = @transform_3, window_bounds = array<i64: 1, 1>}]} {
    %c0_i32 = arith.constant 0 : i32
    %0 = arith.cmpi eq, %arg0, %c0_i32 : i32
    %1 = arith.extui %0 : i1 to i32
    %c0_i32_0 = arith.constant 0 : i32
    %2 = arith.cmpi ne, %1, %c0_i32_0 : i32
    scf.if %2 {
      %cst_20 = arith.constant 0.000000e+00 : f32
      %48 = vector.broadcast %cst_20 : f32 to vector<1x1xf32>
      %c0_21 = arith.constant 0 : index
      %c0_22 = arith.constant 0 : index
      %49 = vector.load %arg5[%c0_21, %c0_22] : memref<1x1xf32, #tpu.memory_space<vmem>>, vector<1x1xf32>
      tpu.vector_store %arg5[%c0_21, %c0_22], %48 {strides = array<i32>} : memref<1x1xf32, #tpu.memory_space<vmem>>, vector<1x1xf32>,
    } else {
    }
    %c0 = arith.constant 0 : index
    %c0_1 = arith.constant 0 : index
    %3 = vector.load %arg1[%c0, %c0_1] : memref<8x16xf32, #tpu.memory_space<vmem>>, vector<8x16xf32>
    %c0_2 = arith.constant 0 : index
    %c0_3 = arith.constant 0 : index
    %4 = vector.load %arg2[%c0_2, %c0_3] : memref<8x1xi32, #tpu.memory_space<vmem>>, vector<8x1xi32>
    %c0_4 = arith.constant 0 : index
    %c0_5 = arith.constant 0 : index
    %5 = vector.load %arg3[%c0_4, %c0_5] : memref<1x16xf32, #tpu.memory_space<vmem>>, vector<1x16xf32>
    %6 = tpu.iota {dimensions = array<i32: 1>} : vector<8x16xi32>
    %7 = vector.broadcast %4 : vector<8x1xi32> to vector<8x16xi32>
    %8 = arith.cmpi eq, %6, %7 : vector<8x16xi32>
    %cst = arith.constant 3.000000e+01 : f32
    %9 = vector.broadcast %cst : f32 to vector<1x16xf32>
    %10 = arith.mulf %9, %5 : vector<1x16xf32>
    %cst_6 = arith.constant 0.000000e+00 : f32
    %11 = vector.shape_cast %10 : vector<1x16xf32> to vector<1x16xf32>
    %12 = vector.broadcast %11 : vector<1x16xf32> to vector<8x16xf32>
    %13 = vector.broadcast %cst_6 : f32 to vector<8x16xf32>
    %14 = arith.select %8, %12, %13 : vector<8x16xi1>, vector<8x16xf32>
    %15 = arith.subf %3, %14 : vector<8x16xf32>
    %cst_7 = arith.constant dense<0xFF800000> : vector<8xf32>
    %16 = vector.multi_reduction <maximumf>, %15, %cst_7 [1] : vector<8x16xf32> to vector<8xf32>
    %17 = vector.shape_cast %16 : vector<8xf32> to vector<8x1xf32>
    %18 = vector.broadcast %17 : vector<8x1xf32> to vector<8x16xf32>
    %19 = arith.subf %15, %18 : vector<8x16xf32>
    %20 = math.exp %19 : vector<8x16xf32>
    %cst_8 = arith.constant dense<0.000000e+00> : vector<8xf32>
    %21 = vector.multi_reduction <add>, %20, %cst_8 [1] : vector<8x16xf32> to vector<8xf32>
    %22 = vector.shape_cast %21 : vector<8xf32> to vector<8x1xf32>
    %23 = math.log %22 : vector<8x1xf32>
    %cst_9 = arith.constant 0.000000e+00 : f32
    %24 = vector.broadcast %cst_9 : f32 to vector<8x16xf32>
    %25 = arith.select %8, %19, %24 : vector<8x16xi1>, vector<8x16xf32>
    %cst_10 = arith.constant dense<0.000000e+00> : vector<8xf32>
    %26 = vector.multi_reduction <add>, %25, %cst_10 [1] : vector<8x16xf32> to vector<8xf32>
    %27 = vector.shape_cast %26 : vector<8xf32> to vector<8x1xf32>
    %28 = arith.subf %23, %27 : vector<8x1xf32>
    %c8_i32 = arith.constant 8 : i32
    %29 = arith.muli %arg0, %c8_i32 : i32
    %30 = tpu.iota {dimensions = array<i32: 0>} : vector<8x1xi32>
    %31 = vector.broadcast %29 : i32 to vector<8x1xi32>
    %32 = arith.addi %31, %30 : vector<8x1xi32>
    %c8_i32_11 = arith.constant 8 : i32
    %33 = vector.broadcast %c8_i32_11 : i32 to vector<8x1xi32>
    %34 = arith.cmpi slt, %32, %33 : vector<8x1xi32>
    %c0_12 = arith.constant 0 : index
    %c0_13 = arith.constant 0 : index
    %35 = vector.load %arg5[%c0_12, %c0_13] : memref<1x1xf32, #tpu.memory_space<vmem>>, vector<1x1xf32>
    %cst_14 = arith.constant 0.000000e+00 : f32
    %36 = vector.broadcast %cst_14 : f32 to vector<8x1xf32>
    %37 = arith.select %34, %28, %36 : vector<8x1xi1>, vector<8x1xf32>
    %38 = vector.shape_cast %37 : vector<8x1xf32> to vector<1x8x1xf32>
    %cst_15 = arith.constant dense<0.000000e+00> : vector<1xf32>
    %39 = vector.multi_reduction <add>, %38, %cst_15 [1, 2] : vector<1x8x1xf32> to vector<1xf32>
    %40 = vector.shape_cast %39 : vector<1xf32> to vector<1x1x1xf32>
    %41 = vector.extract %40[0, 0, 0] : f32 from vector<1x1x1xf32>
    %42 = vector.broadcast %41 : f32 to vector<1x1xf32>
    %43 = arith.addf %35, %42 : vector<1x1xf32>
    %c0_16 = arith.constant 0 : index
    %c0_17 = arith.constant 0 : index
    %44 = vector.load %arg5[%c0_16, %c0_17] : memref<1x1xf32, #tpu.memory_space<vmem>>, vector<1x1xf32>
    tpu.vector_store %arg5[%c0_16, %c0_17], %43 {strides = array<i32>} : memref<1x1xf32, #tpu.memory_space<vmem>>, vector<1x1xf32>,
    %c0_i32_18 = arith.constant 0 : i32
    %45 = arith.cmpi eq, %arg0, %c0_i32_18 : i32
    %46 = arith.extui %45 : i1 to i32
    %c0_i32_19 = arith.constant 0 : i32
    %47 = arith.cmpi ne, %46, %c0_i32_19 : i32
    scf.if %47 {
      %c0_20 = arith.constant 0 : index
      %c0_21 = arith.constant 0 : index
      %48 = vector.load %arg5[%c0_20, %c0_21] : memref<1x1xf32, #tpu.memory_space<vmem>>, vector<1x1xf32>
      %cst_22 = arith.constant 1.250000e-01 : f32
      %49 = vector.broadcast %cst_22 : f32 to vector<1x1xf32>
      %50 = arith.mulf %48, %49 : vector<1x1xf32>
      %c0_23 = arith.constant 0 : index
      %c0_24 = arith.constant 0 : index
      %51 = vector.load %arg4[%c0_23, %c0_24] : memref<1x1xf32, #tpu.memory_space<vmem>>, vector<1x1xf32>
      tpu.vector_store %arg4[%c0_23, %c0_24], %50 {strides = array<i32>} : memref<1x1xf32, #tpu.memory_space<vmem>>, vector<1x1xf32>,
    } else {
    }
    return
  }
  func.func @transform_0(%arg0: i32) -> (i32, i32) {
    %c0_i32 = arith.constant 0 : i32
    %c0_i32_0 = arith.constant 0 : i32
    return %arg0, %c0_i32 : i32, i32
  }
  func.func @transform_1(%arg0: i32) -> (i32, i32) {
    %c0_i32 = arith.constant 0 : i32
    %c0_i32_0 = arith.constant 0 : i32
    return %arg0, %c0_i32 : i32, i32
  }
  func.func @transform_2(%arg0: i32) -> (i32, i32) {
    %c0_i32 = arith.constant 0 : i32
    %c0_i32_0 = arith.constant 0 : i32
    %c0_i32_1 = arith.constant 0 : i32
    return %c0_i32, %c0_i32_0 : i32, i32
  }
  func.func @transform_3(%arg0: i32) -> (i32, i32) {
    %c0_i32 = arith.constant 0 : i32
    %c0_i32_0 = arith.constant 0 : i32
    %c0_i32_1 = arith.constant 0 : i32
    return %c0_i32, %c0_i32_0 : i32, i32
  }
}

</mosaic_0001>

<llo_original>
// kernel: tpu_custom_call.1
$region0: #{tpu_custom_call.1}
  #allocation0 [shape = 'u32[]', space=smem, size = 0x4, offset = 0x4, fixed_abs, tag = 'smem constant byte address 0x4 - core index']
  #allocation1 [shape = 'u32[72,128]{1,0:T(1,128)}', space=vmem, size = 0x9000, scoped, tag = 'internal scratch']
  #allocation2 [shape = 'f32[1,1]{1,0:T(1,128)}', space=vmem, size = 0x200, scoped, tag = 'scratch operand']
  %s0 = inlined_call_operand.vmem [shape: f32[8,16], index: 0, kind: input, shape index: {}]
  %s1 = inlined_call_operand.vmem [shape: s32[8,1], index: 1, kind: input, shape index: {}]
  %s2 = inlined_call_operand.vmem [shape: f32[1,16], index: 2, kind: input, shape index: {}]
  %s3 = inlined_call_operand.hbm [shape: f32[1,1], index: 3, kind: output, shape index: {}]
  %s4 = sld [smem:[#allocation0]]
  $region30: #{tpu_custom_call.1} parent=0
    _
  %s6 = ssub.s32 1, %s4
  %s7 = scalar_select 0, %s6, %s4
  $region1: #{tpu_custom_call.1} parent=0
    #allocation3 [shape = 'u8[512]{0}', space=vmem, size = 0x400, scoped, tag = 'output window, operand 0, single buffered']
    #allocation4 [shape = 's32[1]{0}', space=sflag, size = 0x4, scoped, tag = 'scoped memory for tpu_custom_call.1']
    %8 = vsyncpa [#allocation4], 0
    // Predicated region
    $region2: #{tpu_custom_call.1} parent=1 // pred_check
      _
    $region3: #{tpu_custom_call.1} parent=1 // pred_check_branch
      %10 = sbr.rel (0) target = $region5
    $region4: #{tpu_custom_call.1} parent=1 // pred_region
      _
    $region5: #{tpu_custom_call.1} parent=1 // pred_fallthru
      _
    // Predicated region
    $region6: #{tpu_custom_call.1} parent=1 // pred_check
      _
    $region7: #{tpu_custom_call.1} parent=1 // pred_check_branch
      %12 = sbr.rel (0) target = $region9
    $region8: #{tpu_custom_call.1} parent=1 // pred_region
      _
    $region9: #{tpu_custom_call.1} parent=1 // pred_fallthru
      _
    // Predicated region
    $region10: #{tpu_custom_call.1} parent=1 // pred_check
      _
    $region11: #{tpu_custom_call.1} parent=1 // pred_check_branch
      %14 = sbr.rel (0) target = $region13
    $region12: #{tpu_custom_call.1} parent=1 // pred_region
      _
    $region13: #{tpu_custom_call.1} parent=1 // pred_fallthru
      _
    %p15 = scmp.eq.s32.totalorder 0, 0
    // Predicated region
    $region14: #{tpu_custom_call.1} parent=1 // pred_check
      %p16 = pneg %p15
    $region15: #{tpu_custom_call.1} parent=1 // pred_check_branch
      %18 = sbr.rel (%p16) target = $region17
    $region16: #{tpu_custom_call.1} parent=1 // pred_region
      %vm19 = vcmask 0
      %20 = vst.msk [vmem:[#allocation2] sm:$0x1] %vm19, 0.0
    $region17: #{tpu_custom_call.1} parent=1 // pred_fallthru
      _
    %v21 = vld [vmem:[%s0] sm:$0xff]
    %v22 = vld [vmem:[%s1] sm:$0xff]
    %v23 = vld [vmem:[%s2] sm:$0x1]
    %v24 = vlaneseq
    %v25 = vand.u32 %v24, 127
    %26 = vset.pattern.permute.xlu0 0
    %27 = vperm.xlu0 %26, %v22
    %v28 = vpop.permute.xlu0 %27
    %vm29 = vcmp.eq.s32.totalorder %v25, %v28
    %v30 = vmul.f32 %v23, 30.0
    %v32 = vperm.slane %v30, 0
    %v34 = vsel %vm29, %v32, 0.0
    %v35 = vsub.f32 %v21, %v34
    %vm36 = vcmask 130048
    %v37 = vsel %vm36, %v35, -inf
    %38 = vmax.xlane.f32.xlu0 %v37
    %v39 = vpop.xlane.xlu0 %38
    %v40 = vsub.f32 %v35, %v39
    %v41 = vmul.f32 %v40, 1.442695
    %v42 = vpow.pop %v41
    %v43 = vsel %vm36, %v42, 0.0
    %44 = vadd.xlane.f32.xlu0 %v43
    %v45 = vpop.xlane.xlu0 %44
    %v46 = vlog2.pop %v45
    %v47 = vmul.f32 %v46, 0.6931472
    %v48 = vsel %vm29, %v40, 0.0
    %v49 = vsel %vm36, %v48, 0.0
    %50 = vadd.xlane.f32.xlu0 %v49
    %v51 = vpop.xlane.xlu0 %50
    %v52 = vsub.f32 %v47, %v51
    %s53 = smul.u32 0, 8
    %v54 = vlaneseq
    %v55 = vshrl.u32 %v54, 7
    %v56 = vstv %s53
    %v57 = vadd.s32 %v56, %v55
    %vm58 = vcmp.lt.s32.totalorder %v57, 8
    %v59 = vld [vmem:[#allocation2] sm:$0x1]
    %v60 = vsel %vm58, %v52, 0.0
    %vm61 = vcmask 7168
    %v62 = vsel %vm61, %v60, 0.0
    %63 = vadd.xlane.f32.xlu0 %v62
    %v64 = vpop.xlane.xlu0 %63
    %v65 = vrot.slane %v64, 4
    %v66 = vadd.f32 %v64, %v65
    %v67 = vrot.slane %v66, 2
    %v68 = vadd.f32 %v66, %v67
    %v69 = vrot.slane %v68, 1
    %v70 = vadd.f32 %v68, %v69
    %s71 = vtos %v70
    %v72 = vstv %s71
    %v73 = vadd.f32 %v59, %v72
    %vm74 = vcmask 0
    %75 = vst.msk [vmem:[#allocation2] sm:$0x1] %vm74, %v73
    // Predicated region
    $region18: #{tpu_custom_call.1} parent=1 // pred_check
      %p76 = pneg %p15
    $region19: #{tpu_custom_call.1} parent=1 // pred_check_branch
      %78 = sbr.rel (%p76) target = $region21
    $region20: #{tpu_custom_call.1} parent=1 // pred_region
      %v79 = vld [vmem:[#allocation2] sm:$0x1]
      %v80 = vmul.f32 %v79, 0.125
      %81 = vst.msk [vmem:[#allocation3] sm:$0x1] %vm74, %v80
    $region21: #{tpu_custom_call.1} parent=1 // pred_fallthru
      _
    // Predicated region
    $region22: #{tpu_custom_call.1} parent=1 // pred_check
      _
    $region23: #{tpu_custom_call.1} parent=1 // pred_check_branch
      %83 = sbr.rel (0) target = $region25
    $region24: #{tpu_custom_call.1} parent=1 // pred_region
      %85 = vsyncadd [#allocation4], 0
      %s87 = sshll.u32 [#allocation3], 4
      %s88 = int_to_ptr.vmem [resolvable:$true] %s87
      %s89 = sshll.u32 %s3, 4
      %s90 = int_to_ptr.hbm [resolvable:$true] %s89
      %92 = dma.vmem_to_hbm [thread:$0]  %s88, 16, %s90, [#allocation4]
    $region25: #{tpu_custom_call.1} parent=1 // pred_fallthru
      _
    // Predicated region
    $region26: #{tpu_custom_call.1} parent=1 // pred_check
      _
    $region27: #{tpu_custom_call.1} parent=1 // pred_check_branch
      %94 = sbr.rel (0) target = $region29
    $region28: #{tpu_custom_call.1} parent=1 // pred_region
      %96 = dma.done [#allocation4], 16
    $region29: #{tpu_custom_call.1} parent=1 // pred_fallthru
      _
    %97 = vsyncpa [#allocation4], 1

</llo_original>
